<compile_context>
chip_gen: v7x
topology: tpu7x:2x2x1
jax: 0.10.0
libtpu: 0.0.40
codegen_flags: <defaults>
</compile_context>

<pallas_src>
import functools
import math

import jax
import jax.numpy as jnp
from jax.experimental import pallas as pl
from jax.experimental.pallas import tpu as pltpu

_EPS = 1e-5
_P_DROP = 0.1
_KEEP_SCALE = float(1.0 / (1.0 - _P_DROP))
_HID = 16
_MAX_TILE = 8192        # batch-lanes per tile; comfortably within VMEM limits


# ---------------------------------------------------------------------------
# shared per-tile compute helpers (traced inside the kernels)
# ---------------------------------------------------------------------------
def _fc1_relu(xT, w1, b1):
    # xT: (2, TB); w1: (16, 2); b1: (16, 1).  K=2 -> VPU outer products, no MXU.
    h = w1[:, 0:1] * xT[0:1, :] + w1[:, 1:2] * xT[1:2, :] + b1
    return jnp.maximum(h, 0.0)


def _bn_apply(h, s, ss, gamma, beta, n):
    # single-traversal batch stats: mean = s/n, var = ss/n - mean^2
    # (biased variance, exactly what torch BatchNorm1d uses for normalization in training)
    inv_n = 1.0 / float(n)
    mean = s * inv_n
    var = ss * inv_n - mean * mean
    scale = gamma * jax.lax.rsqrt(var + _EPS)
    shift = beta - mean * scale
    return h * scale + shift


def _valid_cols(tile_idx, tb, batch):
    col = jax.lax.broadcasted_iota(jnp.int32, (1, tb), 1) + tile_idx * tb
    return col < batch


def _masked_moments(h, valid):
    hm = jnp.where(valid, h, 0.0)
    return hm.sum(axis=1, keepdims=True), (hm * hm).sum(axis=1, keepdims=True)


# ---------------------------------------------------------------------------
# kernels
# ---------------------------------------------------------------------------
def _stats1_kernel(x_ref, w1_ref, b1_ref, sum_ref, sq_ref, *, tb, batch):
    i = pl.program_id(0)

    @pl.when(i == 0)
    def _():
        sum_ref[...] = jnp.zeros_like(sum_ref)
        sq_ref[...] = jnp.zeros_like(sq_ref)

    h = _fc1_relu(x_ref[...], w1_ref[...], b1_ref[...])
    s, ss = _masked_moments(h, _valid_cols(i, tb, batch))
    sum_ref[...] += s
    sq_ref[...] += ss


def _stats2_kernel(x_ref, w1_ref, b1_ref, g1_ref, be1_ref,
                   sum1_ref, sq1_ref, w2_ref, b2_ref, m1_ref,
                   sum_ref, sq_ref, *, tb, batch):
    i = pl.program_id(0)

    @pl.when(i == 0)
    def _():
        sum_ref[...] = jnp.zeros_like(sum_ref)
        sq_ref[...] = jnp.zeros_like(sq_ref)

    h = _fc1_relu(x_ref[...], w1_ref[...], b1_ref[...])
    h = _bn_apply(h, sum1_ref[...], sq1_ref[...], g1_ref[...], be1_ref[...], batch)
    h = h * m1_ref[...]                       # dropout 1 (mask pre-scaled by 1/(1-p))

    h2 = jnp.dot(w2_ref[...], h, preferred_element_type=jnp.float32) + b2_ref[...]
    h2 = jnp.maximum(h2, 0.0)

    s, ss = _masked_moments(h2, _valid_cols(i, tb, batch))
    sum_ref[...] += s
    sq_ref[...] += ss


def _final_kernel(x_ref, w1_ref, b1_ref, g1_ref, be1_ref,
                  sum1_ref, sq1_ref, w2_ref, b2_ref, g2_ref, be2_ref,
                  sum2_ref, sq2_ref, w3_ref, b3_ref, m1_ref, m2_ref,
                  o_ref, *, tb, batch):
    h = _fc1_relu(x_ref[...], w1_ref[...], b1_ref[...])
    h = _bn_apply(h, sum1_ref[...], sq1_ref[...], g1_ref[...], be1_ref[...], batch)
    h = h * m1_ref[...]                       # dropout 1

    h2 = jnp.dot(w2_ref[...], h, preferred_element_type=jnp.float32) + b2_ref[...]
    h2 = jnp.maximum(h2, 0.0)
    h2 = _bn_apply(h2, sum2_ref[...], sq2_ref[...], g2_ref[...], be2_ref[...], batch)
    h2 = h2 * m2_ref[...]                     # dropout 2

    # fc3 (N=1): VPU multiply + XLU sublane reduce -> lane-dense (1, TB) store.
    out = jnp.sum(w3_ref[...] * h2, axis=0, keepdims=True) + b3_ref[...]
    o_ref[...] = out.astype(o_ref.dtype)


# ---------------------------------------------------------------------------
# wrapper
# ---------------------------------------------------------------------------
def stage2_forward(x, params, drop_key):
    """x: (B, 2) float32; params: tuple of 10 arrays; drop_key: jax PRNG key.

    Returns (B, 1) float32 — PyTorch stage2 training-mode forward.
    """
    (w1, b1, g1, be1, w2, b2, g2, be2, w3, b3) = params
    B = int(x.shape[0])

    b128 = ((B + 127) // 128) * 128
    TB = min(b128, _MAX_TILE)
    B_pad = ((B + TB - 1) // TB) * TB
    n_tiles = B_pad // TB

    # layout plumbing (outside the kernel): batch on lanes, zero-pad batch.
    xT = jnp.transpose(x).astype(jnp.float32)
    if B_pad != B:
        xT = jnp.pad(xT, ((0, 0), (0, B_pad - B)))

    # dropout keep-masks, pre-scaled by 1/(1-p); same arrays feed passes B and C.
    k1, k2 = jax.random.split(drop_key)
    mask1 = jax.random.bernoulli(k1, 1.0 - _P_DROP, (_HID, B_pad)).astype(jnp.float32) * _KEEP_SCALE
    mask2 = jax.random.bernoulli(k2, 1.0 - _P_DROP, (_HID, B_pad)).astype(jnp.float32) * _KEEP_SCALE

    stat_shape = jax.ShapeDtypeStruct((_HID, 1), jnp.float32)
    pin_stat = pl.BlockSpec((_HID, 1), lambda i: (0, 0))
    pin_w1 = pl.BlockSpec((_HID, 2), lambda i: (0, 0))
    pin_w2 = pl.BlockSpec((_HID, _HID), lambda i: (0, 0))
    pin_b3 = pl.BlockSpec((1, 1), lambda i: (0, 0))
    x_spec = pl.BlockSpec((2, TB), lambda i: (0, i))
    m_spec = pl.BlockSpec((_HID, TB), lambda i: (0, i))

    # ---- pass A: BN1 statistics (sum, sumsq of relu(fc1(x))) -----------------
    sum1, sq1 = pl.pallas_call(
        functools.partial(_stats1_kernel, tb=TB, batch=B),
        out_shape=(stat_shape, stat_shape),
        grid=(n_tiles,),
        in_specs=[x_spec, pin_w1, pin_stat],
        out_specs=(pin_stat, pin_stat),
        compiler_params=pltpu.CompilerParams(dimension_semantics=("arbitrary",)),
    )(xT, w1, b1)

    # ---- pass B: BN2 statistics ----------------------------------------------
    sum2, sq2 = pl.pallas_call(
        functools.partial(_stats2_kernel, tb=TB, batch=B),
        out_shape=(stat_shape, stat_shape),
        grid=(n_tiles,),
        in_specs=[x_spec, pin_w1, pin_stat, pin_stat, pin_stat,
                  pin_stat, pin_stat, pin_w2, pin_stat, m_spec],
        out_specs=(pin_stat, pin_stat),
        compiler_params=pltpu.CompilerParams(dimension_semantics=("arbitrary",)),
    )(xT, w1, b1, g1, be1, sum1, sq1, w2, b2, mask1)

    # ---- pass C: full forward, lane-dense (1, B_pad) output ------------------
    outT = pl.pallas_call(
        functools.partial(_final_kernel, tb=TB, batch=B),
        out_shape=jax.ShapeDtypeStruct((1, B_pad), jnp.float32),
        grid=(n_tiles,),
        in_specs=[x_spec, pin_w1, pin_stat, pin_stat, pin_stat,
                  pin_stat, pin_stat, pin_w2, pin_stat, pin_stat,
                  pin_stat, pin_stat, pin_stat, pin_stat, pin_b3,
                  m_spec, m_spec],
        out_specs=pl.BlockSpec((1, TB), lambda i: (0, i)),
        compiler_params=pltpu.CompilerParams(dimension_semantics=("parallel",)),
    )(xT, w1, b1, g1, be1, sum1, sq1, w2, b2, g2, be2, sum2, sq2, w3, b3,
      mask1, mask2)

    return outT[0, :B].reshape(B, 1)


# ---------------------------------------------------------------------------
# parameter init (matches nn.Linear / nn.BatchNorm1d defaults; feature-major layout)
# ---------------------------------------------------------------------------
def init_params(key):
    k1, k2, k3, k4, k5, k6 = jax.random.split(key, 6)

    def linear(kw, kb, fan_in, fan_out):
        bound = 1.0 / math.sqrt(fan_in)
        w = jax.random.uniform(kw, (fan_out, fan_in), jnp.float32, -bound, bound)
        b = jax.random.uniform(kb, (fan_out, 1), jnp.float32, -bound, bound)
        return w, b

    w1, b1 = linear(k1, k2, 2, 16)        # (16, 2), (16, 1)
    w2, b2 = linear(k3, k4, 16, 16)       # (16, 16), (16, 1)
    w3_row, b3 = linear(k5, k6, 16, 1)    # (1, 16), (1, 1)
    w3 = jnp.transpose(w3_row)            # stored as (16, 1) for the transposed layout

    g1 = jnp.ones((16, 1), jnp.float32)
    be1 = jnp.zeros((16, 1), jnp.float32)
    g2 = jnp.ones((16, 1), jnp.float32)
    be2 = jnp.zeros((16, 1), jnp.float32)

    return (w1, b1, g1, be1, w2, b2, g2, be2, w3, b3)


if __name__ == "__main__":
    key = jax.random.PRNGKey(0)
    kx, kp, kd = jax.random.split(key, 3)

    B = 8
    x = jax.random.normal(kx, (B, 2), dtype=jnp.float32)
    params = init_params(kp)

    out = stage2_forward(x, params, kd)
    out = jax.block_until_ready(out)

    assert out.shape == (B, 1) and out.dtype == jnp.float32
    assert bool(jnp.all(jnp.isfinite(out)))
    print("KERNEL_OK")
</pallas_src>

<mosaic_0001>
module attributes {stable_mosaic.version = 11 : i64} {
  func.func @_stats1_kernel(%arg0: i32, %arg1: memref<2x128xf32, #tpu.memory_space<vmem>>, %arg2: memref<16x2xf32, #tpu.memory_space<vmem>>, %arg3: memref<16x1xf32, #tpu.memory_space<vmem>>, %arg4: memref<16x1xf32, #tpu.memory_space<vmem>>, %arg5: memref<16x1xf32, #tpu.memory_space<vmem>>) attributes {dimension_semantics = [#tpu.dimension_semantics<arbitrary>], iteration_bounds = array<i64: 1>, scalar_prefetch = 0 : i64, scratch_operands = 0 : i64, tpu.core_type = #tpu.core_type<tc>, window_params = [{transform_indices = @transform_0, window_bounds = array<i64: 2, 128>}, {pipeline_mode = #tpu.pipeline_mode<synchronous>, transform_indices = @transform_1, window_bounds = array<i64: 16, 2>}, {pipeline_mode = #tpu.pipeline_mode<synchronous>, transform_indices = @transform_2, window_bounds = array<i64: 16, 1>}, {pipeline_mode = #tpu.pipeline_mode<synchronous>, transform_indices = @transform_3, window_bounds = array<i64: 16, 1>}, {pipeline_mode = #tpu.pipeline_mode<synchronous>, transform_indices = @transform_4, window_bounds = array<i64: 16, 1>}]} {
    %c0_i32 = arith.constant 0 : i32
    %0 = arith.cmpi eq, %arg0, %c0_i32 : i32
    %1 = arith.extui %0 : i1 to i32
    %c0_i32_0 = arith.constant 0 : i32
    %2 = arith.cmpi ne, %1, %c0_i32_0 : i32
    scf.if %2 {
      %cst_17 = arith.constant 0.000000e+00 : f32
      %42 = vector.broadcast %cst_17 : f32 to vector<16x1xf32>
      %c0_18 = arith.constant 0 : index
      %c0_19 = arith.constant 0 : index
      %43 = vector.load %arg4[%c0_18, %c0_19] : memref<16x1xf32, #tpu.memory_space<vmem>>, vector<16x1xf32>
      tpu.vector_store %arg4[%c0_18, %c0_19], %42 {strides = array<i32>} : memref<16x1xf32, #tpu.memory_space<vmem>>, vector<16x1xf32>,
      %cst_20 = arith.constant 0.000000e+00 : f32
      %44 = vector.broadcast %cst_20 : f32 to vector<16x1xf32>
      %c0_21 = arith.constant 0 : index
      %c0_22 = arith.constant 0 : index
      %45 = vector.load %arg5[%c0_21, %c0_22] : memref<16x1xf32, #tpu.memory_space<vmem>>, vector<16x1xf32>
      tpu.vector_store %arg5[%c0_21, %c0_22], %44 {strides = array<i32>} : memref<16x1xf32, #tpu.memory_space<vmem>>, vector<16x1xf32>,
    } else {
    }
    %c0 = arith.constant 0 : index
    %c0_1 = arith.constant 0 : index
    %3 = vector.load %arg1[%c0, %c0_1] : memref<2x128xf32, #tpu.memory_space<vmem>>, vector<2x128xf32>
    %c0_2 = arith.constant 0 : index
    %c0_3 = arith.constant 0 : index
    %4 = vector.load %arg2[%c0_2, %c0_3] : memref<16x2xf32, #tpu.memory_space<vmem>>, vector<16x2xf32>
    %c0_4 = arith.constant 0 : index
    %c0_5 = arith.constant 0 : index
    %5 = vector.load %arg3[%c0_4, %c0_5] : memref<16x1xf32, #tpu.memory_space<vmem>>, vector<16x1xf32>
    %6 = vector.extract_strided_slice %4 {offsets = [0, 0], sizes = [16, 1], strides = [1, 1]} : vector<16x2xf32> to vector<16x1xf32>
    %7 = vector.extract_strided_slice %3 {offsets = [0, 0], sizes = [1, 128], strides = [1, 1]} : vector<2x128xf32> to vector<1x128xf32>
    %8 = vector.broadcast %6 : vector<16x1xf32> to vector<16x128xf32>
    %9 = vector.broadcast %7 : vector<1x128xf32> to vector<16x128xf32>
    %10 = arith.mulf %8, %9 : vector<16x128xf32>
    %11 = vector.extract_strided_slice %4 {offsets = [0, 1], sizes = [16, 1], strides = [1, 1]} : vector<16x2xf32> to vector<16x1xf32>
    %12 = vector.extract_strided_slice %3 {offsets = [1, 0], sizes = [1, 128], strides = [1, 1]} : vector<2x128xf32> to vector<1x128xf32>
    %13 = vector.broadcast %11 : vector<16x1xf32> to vector<16x128xf32>
    %14 = vector.broadcast %12 : vector<1x128xf32> to vector<16x128xf32>
    %15 = arith.mulf %13, %14 : vector<16x128xf32>
    %16 = arith.addf %10, %15 : vector<16x128xf32>
    %17 = vector.broadcast %5 : vector<16x1xf32> to vector<16x128xf32>
    %18 = arith.addf %16, %17 : vector<16x128xf32>
    %cst = arith.constant 0.000000e+00 : f32
    %19 = vector.broadcast %cst : f32 to vector<16x128xf32>
    %20 = arith.maximumf %18, %19 : vector<16x128xf32>
    %21 = tpu.iota {dimensions = array<i32: 1>} : vector<1x128xi32>
    %c128_i32 = arith.constant 128 : i32
    %22 = arith.muli %arg0, %c128_i32 : i32
    %23 = vector.broadcast %22 : i32 to vector<1x128xi32>
    %24 = arith.addi %21, %23 : vector<1x128xi32>
    %c8_i32 = arith.constant 8 : i32
    %25 = vector.broadcast %c8_i32 : i32 to vector<1x128xi32>
    %26 = arith.cmpi slt, %24, %25 : vector<1x128xi32>
    %cst_6 = arith.constant 0.000000e+00 : f32
    %27 = vector.shape_cast %26 : vector<1x128xi1> to vector<1x128xi1>
    %28 = vector.broadcast %27 : vector<1x128xi1> to vector<16x128xi1>
    %29 = vector.broadcast %cst_6 : f32 to vector<16x128xf32>
    %30 = arith.select %28, %20, %29 : vector<16x128xi1>, vector<16x128xf32>
    %cst_7 = arith.constant dense<0.000000e+00> : vector<16xf32>
    %31 = vector.multi_reduction <add>, %30, %cst_7 [1] : vector<16x128xf32> to vector<16xf32>
    %32 = vector.shape_cast %31 : vector<16xf32> to vector<16x1xf32>
    %33 = arith.mulf %30, %30 : vector<16x128xf32>
    %cst_8 = arith.constant dense<0.000000e+00> : vector<16xf32>
    %34 = vector.multi_reduction <add>, %33, %cst_8 [1] : vector<16x128xf32> to vector<16xf32>
    %35 = vector.shape_cast %34 : vector<16xf32> to vector<16x1xf32>
    %c0_9 = arith.constant 0 : index
    %c0_10 = arith.constant 0 : index
    %36 = vector.load %arg4[%c0_9, %c0_10] : memref<16x1xf32, #tpu.memory_space<vmem>>, vector<16x1xf32>
    %37 = arith.addf %36, %32 : vector<16x1xf32>
    %c0_11 = arith.constant 0 : index
    %c0_12 = arith.constant 0 : index
    %38 = vector.load %arg4[%c0_11, %c0_12] : memref<16x1xf32, #tpu.memory_space<vmem>>, vector<16x1xf32>
    tpu.vector_store %arg4[%c0_11, %c0_12], %37 {strides = array<i32>} : memref<16x1xf32, #tpu.memory_space<vmem>>, vector<16x1xf32>,
    %c0_13 = arith.constant 0 : index
    %c0_14 = arith.constant 0 : index
    %39 = vector.load %arg5[%c0_13, %c0_14] : memref<16x1xf32, #tpu.memory_space<vmem>>, vector<16x1xf32>
    %40 = arith.addf %39, %35 : vector<16x1xf32>
    %c0_15 = arith.constant 0 : index
    %c0_16 = arith.constant 0 : index
    %41 = vector.load %arg5[%c0_15, %c0_16] : memref<16x1xf32, #tpu.memory_space<vmem>>, vector<16x1xf32>
    tpu.vector_store %arg5[%c0_15, %c0_16], %40 {strides = array<i32>} : memref<16x1xf32, #tpu.memory_space<vmem>>, vector<16x1xf32>,
    return
  }
  func.func @transform_0(%arg0: i32) -> (i32, i32) {
    %c0_i32 = arith.constant 0 : i32
    %c0_i32_0 = arith.constant 0 : i32
    return %c0_i32, %arg0 : i32, i32
  }
  func.func @transform_1(%arg0: i32) -> (i32, i32) {
    %c0_i32 = arith.constant 0 : i32
    %c0_i32_0 = arith.constant 0 : i32
    %c0_i32_1 = arith.constant 0 : i32
    return %c0_i32, %c0_i32_0 : i32, i32
  }
  func.func @transform_2(%arg0: i32) -> (i32, i32) {
    %c0_i32 = arith.constant 0 : i32
    %c0_i32_0 = arith.constant 0 : i32
    %c0_i32_1 = arith.constant 0 : i32
    return %c0_i32, %c0_i32_0 : i32, i32
  }
  func.func @transform_3(%arg0: i32) -> (i32, i32) {
    %c0_i32 = arith.constant 0 : i32
    %c0_i32_0 = arith.constant 0 : i32
    %c0_i32_1 = arith.constant 0 : i32
    return %c0_i32, %c0_i32_0 : i32, i32
  }
  func.func @transform_4(%arg0: i32) -> (i32, i32) {
    %c0_i32 = arith.constant 0 : i32
    %c0_i32_0 = arith.constant 0 : i32
    %c0_i32_1 = arith.constant 0 : i32
    return %c0_i32, %c0_i32_0 : i32, i32
  }
}

</mosaic_0001>

<llo_original>
// kernel: tpu_custom_call.1
$region0: #{tpu_custom_call.1}
  #allocation0 [shape = 'u32[]', space=smem, size = 0x4, offset = 0x4, fixed_abs, tag = 'smem constant byte address 0x4 - core index']
  #allocation1 [shape = 'u32[144,128]{1,0:T(1,128)}', space=vmem, size = 0x12000, scoped, tag = 'internal scratch']
  %s0 = inlined_call_operand.vmem [shape: f32[2,128], index: 0, kind: input, shape index: {}]
  %s1 = inlined_call_operand.vmem [shape: f32[16,2], index: 1, kind: input, shape index: {}]
  %s2 = inlined_call_operand.vmem [shape: f32[16,1], index: 2, kind: input, shape index: {}]
  %s3 = inlined_call_operand.vmem [shape: f32[16,1], index: 3, kind: output, shape index: {0}]
  %s4 = inlined_call_operand.vmem [shape: f32[16,1], index: 4, kind: output, shape index: {1}]
  %5 = xla_tuple %s3, %s4
  %s6 = sld [smem:[#allocation0]]
  $region34: #{tpu_custom_call.1} parent=0
    _
  %s8 = ssub.s32 1, %s6
  %s9 = scalar_select 0, %s8, %s6
  // Predicated region
  $region2: #{tpu_custom_call.1} parent=0 // pred_check
    _
  $region3: #{tpu_custom_call.1} parent=0 // pred_check_branch
    %11 = sbr.rel (0) target = $region5
  $region4: #{tpu_custom_call.1} parent=0 // pred_region
    _
  $region5: #{tpu_custom_call.1} parent=0 // pred_fallthru
    _
  // Predicated region
  $region6: #{tpu_custom_call.1} parent=0 // pred_check
    _
  $region7: #{tpu_custom_call.1} parent=0 // pred_check_branch
    %13 = sbr.rel (0) target = $region9
  $region8: #{tpu_custom_call.1} parent=0 // pred_region
    _
  $region9: #{tpu_custom_call.1} parent=0 // pred_fallthru
    _
  // Predicated region
  $region10: #{tpu_custom_call.1} parent=0 // pred_check
    _
  $region11: #{tpu_custom_call.1} parent=0 // pred_check_branch
    %15 = sbr.rel (0) target = $region13
  $region12: #{tpu_custom_call.1} parent=0 // pred_region
    _
  $region13: #{tpu_custom_call.1} parent=0 // pred_fallthru
    _
  %p16 = scmp.eq.s32.totalorder 0, 0
  // Predicated region
  $region14: #{tpu_custom_call.1} parent=0 // pred_check
    %p17 = pneg %p16
  $region15: #{tpu_custom_call.1} parent=0 // pred_check_branch
    %19 = sbr.rel (%p17) target = $region17
  $region16: #{tpu_custom_call.1} parent=0 // pred_region
    %vm20 = vcmask 7168
    %21 = vst.msk [vmem:[%s3] sm:$0xff] %vm20, 0.0
    %22 = vst.msk [vmem:[%s3 + $0x8] sm:$0xff] %vm20, 0.0
    %23 = vst.msk [vmem:[%s4] sm:$0xff] %vm20, 0.0
    %24 = vst.msk [vmem:[%s4 + $0x8] sm:$0xff] %vm20, 0.0
  $region17: #{tpu_custom_call.1} parent=0 // pred_fallthru
    _
  %v25 = vld [vmem:[%s0] sm:$0x3]
  %v26 = vld [vmem:[%s1] sm:$0xff]
  %v27 = vld [vmem:[%s1 + $0x8] sm:$0xff]
  %v28 = vld [vmem:[%s2] sm:$0xff]
  %v29 = vld [vmem:[%s2 + $0x8] sm:$0xff]
  %31 = vset.pattern.permute.xlu0 0
  %32 = vperm.xlu0 %31, %v26
  %v33 = vpop.permute.xlu0 %32
  %36 = vset.pattern.permute.xlu0 0
  %37 = vperm.xlu0 %36, %v27
  %v38 = vpop.permute.xlu0 %37
  %v40 = vlaneseq
  %v41 = vshrl.u32 %v40, 7
  %v42 = vsub.s32 0, %v41
  %v43 = vrot.slane %v25, %v42
  %v44 = vmul.f32 %v33, %v43
  %v45 = vmul.f32 %v38, %v43
  %46 = vset.pattern.permute.xlu0 1
  %47 = vperm.xlu0 %46, %v26
  %v48 = vpop.permute.xlu0 %47
  %50 = vset.pattern.permute.xlu0 1
  %51 = vperm.xlu0 %50, %v27
  %v52 = vpop.permute.xlu0 %51
  %v54 = vlaneseq
  %v55 = vshrl.u32 %v54, 7
  %v56 = vsub.s32 1, %v55
  %v57 = vrot.slane %v25, %v56
  %v58 = vmul.f32 %v48, %v57
  %v59 = vmul.f32 %v52, %v57
  %v60 = vadd.f32 %v44, %v58
  %v61 = vadd.f32 %v45, %v59
  %63 = vset.pattern.permute.xlu0 0
  %64 = vperm.xlu0 %63, %v28
  %v65 = vpop.permute.xlu0 %64
  %68 = vset.pattern.permute.xlu0 0
  %69 = vperm.xlu0 %68, %v29
  %v70 = vpop.permute.xlu0 %69
  %v72 = vadd.f32 %v60, %v65
  %v73 = vadd.f32 %v61, %v70
  %v74 = vmax.f32 %v72, 0.0
  %v75 = vmax.f32 %v73, 0.0
  %v76 = vlaneseq
  %v77 = vand.u32 %v76, 127
  %s78 = smul.u32 0, 128
  %v79 = vstv %s78
  %v80 = vadd.s32 %v77, %v79
  %vm81 = vcmp.lt.s32.totalorder %v80, 8
  %v82 = vsel %vm81, 1, 0
  %vm83 = vcmp.eq.s32.totalorder %v82, 1
  %v84 = vsel %vm83, %v74, 0.0
  %v85 = vsel %vm83, %v75, 0.0
  %86 = vadd.xlane.f32.xlu0 %v84
  %v87 = vpop.xlane.xlu0 %86
  %88 = vadd.xlane.f32.xlu0 %v85
  %v89 = vpop.xlane.xlu0 %88
  %v90 = vmul.f32 %v84, %v84
  %v91 = vmul.f32 %v85, %v85
  %92 = vadd.xlane.f32.xlu0 %v90
  %v93 = vpop.xlane.xlu0 %92
  %94 = vadd.xlane.f32.xlu0 %v91
  %v95 = vpop.xlane.xlu0 %94
  %v96 = vld [vmem:[%s3] sm:$0xff]
  %v97 = vld [vmem:[%s3 + $0x8] sm:$0xff]
  %v98 = vadd.f32 %v96, %v87
  %v99 = vadd.f32 %v97, %v89
  %vm100 = vcmask 7168
  %101 = vst.msk [vmem:[%s3] sm:$0xff] %vm100, %v98
  %102 = vst.msk [vmem:[%s3 + $0x8] sm:$0xff] %vm100, %v99
  %v103 = vld [vmem:[%s4] sm:$0xff]
  %v104 = vld [vmem:[%s4 + $0x8] sm:$0xff]
  %v105 = vadd.f32 %v103, %v93
  %v106 = vadd.f32 %v104, %v95
  %107 = vst.msk [vmem:[%s4] sm:$0xff] %vm100, %v105
  %108 = vst.msk [vmem:[%s4 + $0x8] sm:$0xff] %vm100, %v106
  // Predicated region
  $region18: #{tpu_custom_call.1} parent=0 // pred_check
    _
  $region19: #{tpu_custom_call.1} parent=0 // pred_check_branch
    %110 = sbr.rel (0) target = $region21
  $region20: #{tpu_custom_call.1} parent=0 // pred_region
    _
  $region21: #{tpu_custom_call.1} parent=0 // pred_fallthru
    _
  // Predicated region
  $region22: #{tpu_custom_call.1} parent=0 // pred_check
    _
  $region23: #{tpu_custom_call.1} parent=0 // pred_check_branch
    %112 = sbr.rel (0) target = $region25
  $region24: #{tpu_custom_call.1} parent=0 // pred_region
    _
  $region25: #{tpu_custom_call.1} parent=0 // pred_fallthru
    _
  // Predicated region
  $region26: #{tpu_custom_call.1} parent=0 // pred_check
    _
  $region27: #{tpu_custom_call.1} parent=0 // pred_check_branch
    %114 = sbr.rel (0) target = $region29
  $region28: #{tpu_custom_call.1} parent=0 // pred_region
    _
  $region29: #{tpu_custom_call.1} parent=0 // pred_fallthru
    _
  // Predicated region
  $region30: #{tpu_custom_call.1} parent=0 // pred_check
    _
  $region31: #{tpu_custom_call.1} parent=0 // pred_check_branch
    %116 = sbr.rel (0) target = $region33
  $region32: #{tpu_custom_call.1} parent=0 // pred_region
    _
  $region33: #{tpu_custom_call.1} parent=0 // pred_fallthru
    _

</llo_original>
